<compile_context>
chip_gen: v7x
topology: tpu7x:2x2x1
jax: 0.10.0
libtpu: 0.0.40
codegen_flags: <defaults>
</compile_context>

<pallas_src>
import functools

import jax
import jax.numpy as jnp
from jax.experimental import pallas as pl
from jax.experimental.pallas import tpu as pltpu


# ---------------------------------------------------------------------------
# helpers
# ---------------------------------------------------------------------------
def _round_up(x, m):
    return ((x + m - 1) // m) * m


def _pick_tile(n128):
    """Largest tile in {1024,512,256,128} whose row padding overhead <= 25%."""
    for t in (1024, 512, 256, 128):
        if _round_up(n128, t) <= n128 + n128 // 4:
            return t
    return 128


# ---------------------------------------------------------------------------
# fused layer kernel (whole layer resident in VMEM, small/medium graphs)
# ---------------------------------------------------------------------------
def _fused_layer_kernel(x_ref, ns_ref, w_ref, a_ref, nd_ref, b_ref, o_ref, *,
                        apply_relu):
    # project: H = (X * norm_src) @ W      (bf16 operands, f32 accumulation)
    xs = (x_ref[...].astype(jnp.float32) * ns_ref[...]).astype(jnp.bfloat16)
    h = jnp.dot(xs, w_ref[...],
                preferred_element_type=jnp.float32).astype(jnp.bfloat16)
    # aggregate: O = relu?((A @ H) * norm_dst + b)
    out = jnp.dot(a_ref[...], h, preferred_element_type=jnp.float32)
    out = out * nd_ref[...] + b_ref[...]
    if apply_relu:
        out = jnp.maximum(out, 0.0)
    o_ref[...] = out.astype(o_ref.dtype)


def _fused_layer(x_p, ns_p, w_p, a_p, nd_p, b_p, *, apply_relu, out_dtype):
    npad, finp = x_p.shape
    fop = w_p.shape[1]
    kernel = functools.partial(_fused_layer_kernel, apply_relu=apply_relu)
    return pl.pallas_call(
        kernel,
        out_shape=jax.ShapeDtypeStruct((npad, fop), out_dtype),
        grid_spec=pltpu.PrefetchScalarGridSpec(
            num_scalar_prefetch=0,
            grid=(1,),
            in_specs=[
                pl.BlockSpec((npad, finp), lambda i: (0, 0)),   # X (bf16)
                pl.BlockSpec((npad, 1), lambda i: (0, 0)),      # norm_src
                pl.BlockSpec((finp, fop), lambda i: (0, 0)),    # W (bf16)
                pl.BlockSpec((npad, npad), lambda i: (0, 0)),   # A (bf16)
                pl.BlockSpec((npad, 1), lambda i: (0, 0)),      # norm_dst
                pl.BlockSpec((1, fop), lambda i: (0, 0)),       # bias
            ],
            out_specs=pl.BlockSpec((npad, fop), lambda i: (0, 0)),
        ),
        compiler_params=pltpu.CompilerParams(
            dimension_semantics=("arbitrary",),
            vmem_limit_bytes=40 << 20),
    )(x_p, ns_p, w_p, a_p, nd_p, b_p)


# ---------------------------------------------------------------------------
# streaming kernels (large graphs)
# ---------------------------------------------------------------------------
def _project_kernel(x_ref, ns_ref, w_ref, h_ref):
    """H_tile = (X_tile * norm_src_tile) @ W   (bf16 MXU, f32 accumulation)."""
    xs = (x_ref[...].astype(jnp.float32) * ns_ref[...]).astype(jnp.bfloat16)
    h = jnp.dot(xs, w_ref[...], preferred_element_type=jnp.float32)
    h_ref[...] = h.astype(h_ref.dtype)


def _project(x_p, ns_p, w_p, *, tm):
    npad, finp = x_p.shape
    fop = w_p.shape[1]
    return pl.pallas_call(
        _project_kernel,
        out_shape=jax.ShapeDtypeStruct((npad, fop), jnp.bfloat16),
        grid_spec=pltpu.PrefetchScalarGridSpec(
            num_scalar_prefetch=0,
            grid=(npad // tm,),
            in_specs=[
                pl.BlockSpec((tm, finp), lambda i: (i, 0)),
                pl.BlockSpec((tm, 1), lambda i: (i, 0)),
                pl.BlockSpec((finp, fop), lambda i: (0, 0)),
            ],
            out_specs=pl.BlockSpec((tm, fop), lambda i: (i, 0)),
        ),
        compiler_params=pltpu.CompilerParams(
            dimension_semantics=("parallel",),
            vmem_limit_bytes=32 << 20),
    )(x_p, ns_p, w_p)


def _aggregate_kernel(a_ref, h_ref, nd_ref, b_ref, o_ref, acc_ref, *,
                      tk, h_resident, apply_relu):
    """acc += A_tile @ H over K; finalize with dst-norm + bias (+ ReLU)."""
    k = pl.program_id(1)

    @pl.when(k == 0)
    def _():
        acc_ref[...] = jnp.zeros_like(acc_ref)

    if h_resident:
        start = pl.multiple_of(k * tk, tk)
        h_blk = h_ref[pl.ds(start, tk), :]      # slice of the VMEM-resident H
    else:
        h_blk = h_ref[...]                      # streamed (tk, fop) tile
    acc_ref[...] += jnp.dot(a_ref[...], h_blk,
                            preferred_element_type=jnp.float32)

    @pl.when(k == pl.num_programs(1) - 1)
    def _():
        out = acc_ref[...] * nd_ref[...] + b_ref[...]
        if apply_relu:
            out = jnp.maximum(out, 0.0)
        o_ref[...] = out.astype(o_ref.dtype)


def _aggregate(a_p, h_p, nd_p, b_p, *, tm, tk, apply_relu, out_dtype):
    npad = a_p.shape[0]
    fop = h_p.shape[1]
    # Keep the whole projected-feature matrix resident in VMEM unless it is
    # itself large (> 8 MiB) -- removes the per-row-tile H re-stream.
    h_resident = (npad * fop * 2) <= (8 << 20)
    if h_resident:
        h_spec = pl.BlockSpec((npad, fop), lambda i, k: (0, 0))
    else:
        h_spec = pl.BlockSpec((tk, fop), lambda i, k: (k, 0))
    kernel = functools.partial(_aggregate_kernel, tk=tk,
                               h_resident=h_resident, apply_relu=apply_relu)
    return pl.pallas_call(
        kernel,
        out_shape=jax.ShapeDtypeStruct((npad, fop), out_dtype),
        grid_spec=pltpu.PrefetchScalarGridSpec(
            num_scalar_prefetch=0,
            grid=(npad // tm, npad // tk),
            in_specs=[
                pl.BlockSpec((tm, tk), lambda i, k: (i, k)),   # A[dst, src]
                h_spec,                                        # H (resident)
                pl.BlockSpec((tm, 1), lambda i, k: (i, 0)),    # dst norm
                pl.BlockSpec((1, fop), lambda i, k: (0, 0)),   # bias
            ],
            out_specs=pl.BlockSpec((tm, fop), lambda i, k: (i, 0)),
            scratch_shapes=[pltpu.VMEM((tm, fop), jnp.float32)],
        ),
        compiler_params=pltpu.CompilerParams(
            dimension_semantics=("parallel", "arbitrary"),
            vmem_limit_bytes=32 << 20),
    )(a_p, h_p, nd_p, b_p)


# ---------------------------------------------------------------------------
# GCN forward (matches GCN.forward: ReLU after every layer except the last)
# ---------------------------------------------------------------------------
def gcn_forward(adj, x, params):
    """adj: (N, N) dense A[dst, src], x: (N, in_dim), params: [(W, b), ...]."""
    n = adj.shape[0]
    fin = x.shape[1]
    fout = params[-1][0].shape[1]

    n128 = _round_up(n, 128)
    fused = n128 <= 2048                       # whole layer fits VMEM comfortably
    if fused:
        npad = n128
        tm = tk = npad
    else:
        tm = _pick_tile(n128)
        tk = tm
        npad = _round_up(n128, tm)

    # --- single pad+cast of the adjacency (0/1 exact in bf16) ---
    a_p = jnp.zeros((npad, npad), jnp.bfloat16).at[:n, :n].set(
        adj.astype(jnp.bfloat16))

    # --- degree norms computed once from the padded A (norm='both') ---
    # TODO(synk): DGL raises on zero-in-degree nodes; we clamp to 1 instead.
    deg_out = jnp.maximum(jnp.sum(a_p, axis=0, dtype=jnp.float32), 1.0)
    deg_in = jnp.maximum(jnp.sum(a_p, axis=1, dtype=jnp.float32), 1.0)
    ns_p = jax.lax.rsqrt(deg_out)[:, None]     # (Np, 1) src norm
    nd_p = jax.lax.rsqrt(deg_in)[:, None]      # (Np, 1) dst norm

    finp = _round_up(fin, 128)
    h = jnp.zeros((npad, finp), jnp.bfloat16).at[:n, :fin].set(
        x.astype(jnp.bfloat16))

    n_layers = len(params)
    for i, (w, b) in enumerate(params):
        fi, fo = w.shape
        fip = _round_up(fi, 128)
        fop = _round_up(fo, 128)
        w_p = jnp.zeros((fip, fop), jnp.bfloat16).at[:fi, :fo].set(
            w.astype(jnp.bfloat16))
        b_p = jnp.zeros((1, fop), jnp.float32).at[0, :fo].set(b)

        last = (i == n_layers - 1)
        out_dtype = jnp.float32 if last else jnp.bfloat16   # bf16 intermediates

        if fused:
            h = _fused_layer(h, ns_p, w_p, a_p, nd_p, b_p,
                             apply_relu=not last, out_dtype=out_dtype)
        else:
            h_proj = _project(h, ns_p, w_p, tm=tm)
            h = _aggregate(a_p, h_proj, nd_p, b_p, tm=tm, tk=tk,
                           apply_relu=not last, out_dtype=out_dtype)

    return h[:n, :fout]


# ---------------------------------------------------------------------------
# parameter init (replicates GCN.__init__: xavier-uniform W, zero bias)
# ---------------------------------------------------------------------------
def xavier_uniform(key, fan_in, fan_out):
    bound = jnp.sqrt(6.0 / (fan_in + fan_out))
    return jax.random.uniform(
        key, (fan_in, fan_out), dtype=jnp.float32, minval=-bound, maxval=bound)


def init_gcn_params(key, in_dim, hid_dim, out_dim, n_layers):
    dims = [in_dim] + [hid_dim] * (n_layers - 1) + [out_dim]
    params = []
    for i in range(n_layers):
        key, sub = jax.random.split(key)
        w = xavier_uniform(sub, dims[i], dims[i + 1])
        b = jnp.zeros((dims[i + 1],), dtype=jnp.float32)
        params.append((w, b))
    return params


if __name__ == "__main__":
    key = jax.random.PRNGKey(0)

    N = 8          # nodes
    in_dim = 16
    hid_dim = 32
    out_dim = 8
    n_layers = 2

    k_adj, k_feat, k_param = jax.random.split(key, 3)

    # Random directed graph (dense adjacency A[dst, src]) with self-loops so
    # every node has in-degree >= 1 (matches DGL's zero-in-degree check).
    adj = (jax.random.uniform(k_adj, (N, N)) < 0.3).astype(jnp.float32)
    adj = jnp.maximum(adj, jnp.eye(N, dtype=jnp.float32))

    x = jax.random.normal(k_feat, (N, in_dim), dtype=jnp.float32)
    params = init_gcn_params(k_param, in_dim, hid_dim, out_dim, n_layers)

    gcn_fwd = jax.jit(gcn_forward)
    out = gcn_fwd(adj, x, params)
    out = jax.block_until_ready(out)
    assert out.shape == (N, out_dim)
    print("KERNEL_OK")
</pallas_src>

<mosaic_0001>
module attributes {stable_mosaic.version = 11 : i64} {
  func.func @_fused_layer_kernel(%arg0: i32, %arg1: memref<128x128xbf16, #tpu.memory_space<vmem>>, %arg2: memref<128x1xf32, #tpu.memory_space<vmem>>, %arg3: memref<128x128xbf16, #tpu.memory_space<vmem>>, %arg4: memref<128x128xbf16, #tpu.memory_space<vmem>>, %arg5: memref<128x1xf32, #tpu.memory_space<vmem>>, %arg6: memref<1x128xf32, #tpu.memory_space<vmem>>, %arg7: memref<128x128xbf16, #tpu.memory_space<vmem>>) attributes {dimension_semantics = [#tpu.dimension_semantics<arbitrary>], iteration_bounds = array<i64: 1>, scalar_prefetch = 0 : i64, scratch_operands = 0 : i64, tpu.core_type = #tpu.core_type<tc>, window_params = [{pipeline_mode = #tpu.pipeline_mode<synchronous>, transform_indices = @transform_0, window_bounds = array<i64: 128, 128>}, {pipeline_mode = #tpu.pipeline_mode<synchronous>, transform_indices = @transform_1, window_bounds = array<i64: 128, 1>}, {pipeline_mode = #tpu.pipeline_mode<synchronous>, transform_indices = @transform_2, window_bounds = array<i64: 128, 128>}, {pipeline_mode = #tpu.pipeline_mode<synchronous>, transform_indices = @transform_3, window_bounds = array<i64: 128, 128>}, {pipeline_mode = #tpu.pipeline_mode<synchronous>, transform_indices = @transform_4, window_bounds = array<i64: 128, 1>}, {pipeline_mode = #tpu.pipeline_mode<synchronous>, transform_indices = @transform_5, window_bounds = array<i64: 1, 128>}, {pipeline_mode = #tpu.pipeline_mode<synchronous>, transform_indices = @transform_6, window_bounds = array<i64: 128, 128>}]} {
    %c0 = arith.constant 0 : index
    %c0_0 = arith.constant 0 : index
    %0 = vector.load %arg1[%c0, %c0_0] : memref<128x128xbf16, #tpu.memory_space<vmem>>, vector<128x128xbf16>
    %1 = arith.extf %0 : vector<128x128xbf16> to vector<128x128xf32>
    %c0_1 = arith.constant 0 : index
    %c0_2 = arith.constant 0 : index
    %2 = vector.load %arg2[%c0_1, %c0_2] : memref<128x1xf32, #tpu.memory_space<vmem>>, vector<128x1xf32>
    %3 = vector.broadcast %2 : vector<128x1xf32> to vector<128x128xf32>
    %4 = arith.mulf %1, %3 : vector<128x128xf32>
    %5 = arith.truncf %4 : vector<128x128xf32> to vector<128x128xbf16>
    %c0_3 = arith.constant 0 : index
    %c0_4 = arith.constant 0 : index
    %6 = vector.load %arg3[%c0_3, %c0_4] : memref<128x128xbf16, #tpu.memory_space<vmem>>, vector<128x128xbf16>
    %cst = arith.constant dense<0.000000e+00> : vector<128x128xf32>
    %7 = tpu.matmul %5, %6, %cst {dimension_numbers = #tpu.dot_dimension_numbers<[1], [0], [0], [1], [0, 0, 1, 1], [], []>} : vector<128x128xbf16>, vector<128x128xbf16>, vector<128x128xf32> -> vector<128x128xf32>
    %8 = arith.truncf %7 : vector<128x128xf32> to vector<128x128xbf16>
    %c0_5 = arith.constant 0 : index
    %c0_6 = arith.constant 0 : index
    %9 = vector.load %arg4[%c0_5, %c0_6] : memref<128x128xbf16, #tpu.memory_space<vmem>>, vector<128x128xbf16>
    %cst_7 = arith.constant dense<0.000000e+00> : vector<128x128xf32>
    %10 = tpu.matmul %9, %8, %cst_7 {dimension_numbers = #tpu.dot_dimension_numbers<[1], [0], [0], [1], [0, 0, 1, 1], [], []>} : vector<128x128xbf16>, vector<128x128xbf16>, vector<128x128xf32> -> vector<128x128xf32>
    %c0_8 = arith.constant 0 : index
    %c0_9 = arith.constant 0 : index
    %11 = vector.load %arg5[%c0_8, %c0_9] : memref<128x1xf32, #tpu.memory_space<vmem>>, vector<128x1xf32>
    %12 = vector.broadcast %11 : vector<128x1xf32> to vector<128x128xf32>
    %13 = arith.mulf %10, %12 : vector<128x128xf32>
    %c0_10 = arith.constant 0 : index
    %c0_11 = arith.constant 0 : index
    %14 = vector.load %arg6[%c0_10, %c0_11] : memref<1x128xf32, #tpu.memory_space<vmem>>, vector<1x128xf32>
    %15 = vector.broadcast %14 : vector<1x128xf32> to vector<128x128xf32>
    %16 = arith.addf %13, %15 : vector<128x128xf32>
    %cst_12 = arith.constant 0.000000e+00 : f32
    %17 = vector.broadcast %cst_12 : f32 to vector<128x128xf32>
    %18 = arith.maximumf %16, %17 : vector<128x128xf32>
    %19 = arith.truncf %18 : vector<128x128xf32> to vector<128x128xbf16>
    %c0_13 = arith.constant 0 : index
    %c0_14 = arith.constant 0 : index
    %20 = vector.load %arg7[%c0_13, %c0_14] : memref<128x128xbf16, #tpu.memory_space<vmem>>, vector<128x128xbf16>
    tpu.vector_store %arg7[%c0_13, %c0_14], %19 {strides = array<i32>} : memref<128x128xbf16, #tpu.memory_space<vmem>>, vector<128x128xbf16>,
    return
  }
  func.func @transform_0(%arg0: i32) -> (i32, i32) {
    %c0_i32 = arith.constant 0 : i32
    %c0_i32_0 = arith.constant 0 : i32
    %c0_i32_1 = arith.constant 0 : i32
    return %c0_i32, %c0_i32_0 : i32, i32
  }
  func.func @transform_1(%arg0: i32) -> (i32, i32) {
    %c0_i32 = arith.constant 0 : i32
    %c0_i32_0 = arith.constant 0 : i32
    %c0_i32_1 = arith.constant 0 : i32
    return %c0_i32, %c0_i32_0 : i32, i32
  }
  func.func @transform_2(%arg0: i32) -> (i32, i32) {
    %c0_i32 = arith.constant 0 : i32
    %c0_i32_0 = arith.constant 0 : i32
    %c0_i32_1 = arith.constant 0 : i32
    return %c0_i32, %c0_i32_0 : i32, i32
  }
  func.func @transform_3(%arg0: i32) -> (i32, i32) {
    %c0_i32 = arith.constant 0 : i32
    %c0_i32_0 = arith.constant 0 : i32
    %c0_i32_1 = arith.constant 0 : i32
    return %c0_i32, %c0_i32_0 : i32, i32
  }
  func.func @transform_4(%arg0: i32) -> (i32, i32) {
    %c0_i32 = arith.constant 0 : i32
    %c0_i32_0 = arith.constant 0 : i32
    %c0_i32_1 = arith.constant 0 : i32
    return %c0_i32, %c0_i32_0 : i32, i32
  }
  func.func @transform_5(%arg0: i32) -> (i32, i32) {
    %c0_i32 = arith.constant 0 : i32
    %c0_i32_0 = arith.constant 0 : i32
    %c0_i32_1 = arith.constant 0 : i32
    return %c0_i32, %c0_i32_0 : i32, i32
  }
  func.func @transform_6(%arg0: i32) -> (i32, i32) {
    %c0_i32 = arith.constant 0 : i32
    %c0_i32_0 = arith.constant 0 : i32
    %c0_i32_1 = arith.constant 0 : i32
    return %c0_i32, %c0_i32_0 : i32, i32
  }
}

module attributes {stable_mosaic.version = 11 : i64} {
  func.func @_fused_layer_kernel(%arg0: i32, %arg1: memref<128x128xbf16, #tpu.memory_space<vmem>>, %arg2: memref<128x1xf32, #tpu.memory_space<vmem>>, %arg3: memref<128x128xbf16, #tpu.memory_space<vmem>>, %arg4: memref<128x128xbf16, #tpu.memory_space<vmem>>, %arg5: memref<128x1xf32, #tpu.memory_space<vmem>>, %arg6: memref<1x128xf32, #tpu.memory_space<vmem>>, %arg7: memref<128x128xf32, #tpu.memory_space<vmem>>) attributes {dimension_semantics = [#tpu.dimension_semantics<arbitrary>], iteration_bounds = array<i64: 1>, scalar_prefetch = 0 : i64, scratch_operands = 0 : i64, tpu.core_type = #tpu.core_type<tc>, window_params = [{pipeline_mode = #tpu.pipeline_mode<synchronous>, transform_indices = @transform_0, window_bounds = array<i64: 128, 128>}, {pipeline_mode = #tpu.pipeline_mode<synchronous>, transform_indices = @transform_1, window_bounds = array<i64: 128, 1>}, {pipeline_mode = #tpu.pipeline_mode<synchronous>, transform_indices = @transform_2, window_bounds = array<i64: 128, 128>}, {pipeline_mode = #tpu.pipeline_mode<synchronous>, transform_indices = @transform_3, window_bounds = array<i64: 128, 128>}, {pipeline_mode = #tpu.pipeline_mode<synchronous>, transform_indices = @transform_4, window_bounds = array<i64: 128, 1>}, {pipeline_mode = #tpu.pipeline_mode<synchronous>, transform_indices = @transform_5, window_bounds = array<i64: 1, 128>}, {pipeline_mode = #tpu.pipeline_mode<synchronous>, transform_indices = @transform_6, window_bounds = array<i64: 128, 128>}]} {
    %c0 = arith.constant 0 : index
    %c0_0 = arith.constant 0 : index
    %0 = vector.load %arg1[%c0, %c0_0] : memref<128x128xbf16, #tpu.memory_space<vmem>>, vector<128x128xbf16>
    %1 = arith.extf %0 : vector<128x128xbf16> to vector<128x128xf32>
    %c0_1 = arith.constant 0 : index
    %c0_2 = arith.constant 0 : index
    %2 = vector.load %arg2[%c0_1, %c0_2] : memref<128x1xf32, #tpu.memory_space<vmem>>, vector<128x1xf32>
    %3 = vector.broadcast %2 : vector<128x1xf32> to vector<128x128xf32>
    %4 = arith.mulf %1, %3 : vector<128x128xf32>
    %5 = arith.truncf %4 : vector<128x128xf32> to vector<128x128xbf16>
    %c0_3 = arith.constant 0 : index
    %c0_4 = arith.constant 0 : index
    %6 = vector.load %arg3[%c0_3, %c0_4] : memref<128x128xbf16, #tpu.memory_space<vmem>>, vector<128x128xbf16>
    %cst = arith.constant dense<0.000000e+00> : vector<128x128xf32>
    %7 = tpu.matmul %5, %6, %cst {dimension_numbers = #tpu.dot_dimension_numbers<[1], [0], [0], [1], [0, 0, 1, 1], [], []>} : vector<128x128xbf16>, vector<128x128xbf16>, vector<128x128xf32> -> vector<128x128xf32>
    %8 = arith.truncf %7 : vector<128x128xf32> to vector<128x128xbf16>
    %c0_5 = arith.constant 0 : index
    %c0_6 = arith.constant 0 : index
    %9 = vector.load %arg4[%c0_5, %c0_6] : memref<128x128xbf16, #tpu.memory_space<vmem>>, vector<128x128xbf16>
    %cst_7 = arith.constant dense<0.000000e+00> : vector<128x128xf32>
    %10 = tpu.matmul %9, %8, %cst_7 {dimension_numbers = #tpu.dot_dimension_numbers<[1], [0], [0], [1], [0, 0, 1, 1], [], []>} : vector<128x128xbf16>, vector<128x128xbf16>, vector<128x128xf32> -> vector<128x128xf32>
    %c0_8 = arith.constant 0 : index
    %c0_9 = arith.constant 0 : index
    %11 = vector.load %arg5[%c0_8, %c0_9] : memref<128x1xf32, #tpu.memory_space<vmem>>, vector<128x1xf32>
    %12 = vector.broadcast %11 : vector<128x1xf32> to vector<128x128xf32>
    %13 = arith.mulf %10, %12 : vector<128x128xf32>
    %c0_10 = arith.constant 0 : index
    %c0_11 = arith.constant 0 : index
    %14 = vector.load %arg6[%c0_10, %c0_11] : memref<1x128xf32, #tpu.memory_space<vmem>>, vector<1x128xf32>
    %15 = vector.broadcast %14 : vector<1x128xf32> to vector<128x128xf32>
    %16 = arith.addf %13, %15 : vector<128x128xf32>
    %c0_12 = arith.constant 0 : index
    %c0_13 = arith.constant 0 : index
    %17 = vector.load %arg7[%c0_12, %c0_13] : memref<128x128xf32, #tpu.memory_space<vmem>>, vector<128x128xf32>
    tpu.vector_store %arg7[%c0_12, %c0_13], %16 {strides = array<i32>} : memref<128x128xf32, #tpu.memory_space<vmem>>, vector<128x128xf32>,
    return
  }
  func.func @transform_0(%arg0: i32) -> (i32, i32) {
    %c0_i32 = arith.constant 0 : i32
    %c0_i32_0 = arith.constant 0 : i32
    %c0_i32_1 = arith.constant 0 : i32
    return %c0_i32, %c0_i32_0 : i32, i32
  }
  func.func @transform_1(%arg0: i32) -> (i32, i32) {
    %c0_i32 = arith.constant 0 : i32
    %c0_i32_0 = arith.constant 0 : i32
    %c0_i32_1 = arith.constant 0 : i32
    return %c0_i32, %c0_i32_0 : i32, i32
  }
  func.func @transform_2(%arg0: i32) -> (i32, i32) {
    %c0_i32 = arith.constant 0 : i32
    %c0_i32_0 = arith.constant 0 : i32
    %c0_i32_1 = arith.constant 0 : i32
    return %c0_i32, %c0_i32_0 : i32, i32
  }
  func.func @transform_3(%arg0: i32) -> (i32, i32) {
    %c0_i32 = arith.constant 0 : i32
    %c0_i32_0 = arith.constant 0 : i32
    %c0_i32_1 = arith.constant 0 : i32
    return %c0_i32, %c0_i32_0 : i32, i32
  }
  func.func @transform_4(%arg0: i32) -> (i32, i32) {
    %c0_i32 = arith.constant 0 : i32
    %c0_i32_0 = arith.constant 0 : i32
    %c0_i32_1 = arith.constant 0 : i32
    return %c0_i32, %c0_i32_0 : i32, i32
  }
  func.func @transform_5(%arg0: i32) -> (i32, i32) {
    %c0_i32 = arith.constant 0 : i32
    %c0_i32_0 = arith.constant 0 : i32
    %c0_i32_1 = arith.constant 0 : i32
    return %c0_i32, %c0_i32_0 : i32, i32
  }
  func.func @transform_6(%arg0: i32) -> (i32, i32) {
    %c0_i32 = arith.constant 0 : i32
    %c0_i32_0 = arith.constant 0 : i32
    %c0_i32_1 = arith.constant 0 : i32
    return %c0_i32, %c0_i32_0 : i32, i32
  }
}

</mosaic_0001>

<llo_original>
// kernel: gcn_forward.3
$region0: #{gcn_forward.3}
  #allocation0 [shape = 'u32[]', space=smem, size = 0x4, offset = 0x4, fixed_abs, tag = 'smem constant byte address 0x4 - core index']
  #allocation1 [shape = 'u32[144,128]{1,0:T(1,128)}', space=vmem, size = 0x12000, scoped, tag = 'internal scratch']
  %s0 = inlined_call_operand.vmem [shape: bf16[128,128], index: 0, kind: input, shape index: {}]
  %s1 = inlined_call_operand.vmem [shape: f32[128,1], index: 1, kind: input, shape index: {}]
  %s2 = inlined_call_operand.vmem [shape: bf16[128,128], index: 2, kind: input, shape index: {}]
  %s3 = inlined_call_operand.vmem [shape: bf16[128,128], index: 3, kind: input, shape index: {}]
  %s4 = inlined_call_operand.vmem [shape: f32[128,1], index: 4, kind: input, shape index: {}]
  %s5 = inlined_call_operand.vmem [shape: f32[1,128], index: 5, kind: input, shape index: {}]
  %s6 = inlined_call_operand.vmem [shape: f32[128,128], index: 6, kind: output, shape index: {}]
  %s7 = sld [smem:[#allocation0]]
  $region34: #{gcn_forward.3} parent=0
    _
  %s9 = ssub.s32 1, %s7
  %s10 = scalar_select 0, %s9, %s7
  // Predicated region
  $region2: #{gcn_forward.3} parent=0 // pred_check
    _
  $region3: #{gcn_forward.3} parent=0 // pred_check_branch
    %12 = sbr.rel (0) target = $region5
  $region4: #{gcn_forward.3} parent=0 // pred_region
    _
  $region5: #{gcn_forward.3} parent=0 // pred_fallthru
    _
  // Predicated region
  $region6: #{gcn_forward.3} parent=0 // pred_check
    _
  $region7: #{gcn_forward.3} parent=0 // pred_check_branch
    %14 = sbr.rel (0) target = $region9
  $region8: #{gcn_forward.3} parent=0 // pred_region
    _
  $region9: #{gcn_forward.3} parent=0 // pred_fallthru
    _
  // Predicated region
  $region10: #{gcn_forward.3} parent=0 // pred_check
    _
  $region11: #{gcn_forward.3} parent=0 // pred_check_branch
    %16 = sbr.rel (0) target = $region13
  $region12: #{gcn_forward.3} parent=0 // pred_region
    _
  $region13: #{gcn_forward.3} parent=0 // pred_fallthru
    _
  // Predicated region
  $region14: #{gcn_forward.3} parent=0 // pred_check
    _
  $region15: #{gcn_forward.3} parent=0 // pred_check_branch
    %18 = sbr.rel (0) target = $region17
  $region16: #{gcn_forward.3} parent=0 // pred_region
    _
  $region17: #{gcn_forward.3} parent=0 // pred_fallthru
    _
  // Predicated region
  $region18: #{gcn_forward.3} parent=0 // pred_check
    _
  $region19: #{gcn_forward.3} parent=0 // pred_check_branch
    %20 = sbr.rel (0) target = $region21
  $region20: #{gcn_forward.3} parent=0 // pred_region
    _
  $region21: #{gcn_forward.3} parent=0 // pred_fallthru
    _
  // Predicated region
  $region22: #{gcn_forward.3} parent=0 // pred_check
    _
  $region23: #{gcn_forward.3} parent=0 // pred_check_branch
    %22 = sbr.rel (0) target = $region25
  $region24: #{gcn_forward.3} parent=0 // pred_region
    _
  $region25: #{gcn_forward.3} parent=0 // pred_fallthru
    _
  %v24 = vld [vmem:[%s0] sm:$0xf]
  %v25 = vld [vmem:[%s0 + $0x4] sm:$0xf]
  %v26 = vld [vmem:[%s0 + $0x8] sm:$0xf]
  %v27 = vld [vmem:[%s0 + $0xc] sm:$0xf]
  %v28 = vld [vmem:[%s0 + $0x10] sm:$0xf]
  %v29 = vld [vmem:[%s0 + $0x14] sm:$0xf]
  %v30 = vld [vmem:[%s0 + $0x18] sm:$0xf]
  %v31 = vld [vmem:[%s0 + $0x1c] sm:$0xf]
  %v32 = vld [vmem:[%s0 + $0x20] sm:$0xf]
  %v33 = vld [vmem:[%s0 + $0x24] sm:$0xf]
  %v34 = vld [vmem:[%s0 + $0x28] sm:$0xf]
  %v35 = vld [vmem:[%s0 + $0x2c] sm:$0xf]
  %v36 = vld [vmem:[%s0 + $0x30] sm:$0xf]
  %v37 = vld [vmem:[%s0 + $0x34] sm:$0xf]
  %v38 = vld [vmem:[%s0 + $0x38] sm:$0xf]
  %v39 = vld [vmem:[%s0 + $0x3c] sm:$0xf]
  %v40 = vunpack.c.l.bf16 %v24
  %v41 = vunpack.c.l.bf16 %v25
  %v42 = vunpack.c.l.bf16 %v26
  %v43 = vunpack.c.l.bf16 %v27
  %v44 = vunpack.c.l.bf16 %v28
  %v45 = vunpack.c.l.bf16 %v29
  %v46 = vunpack.c.l.bf16 %v30
  %v47 = vunpack.c.l.bf16 %v31
  %v48 = vunpack.c.l.bf16 %v32
  %v49 = vunpack.c.l.bf16 %v33
  %v50 = vunpack.c.l.bf16 %v34
  %v51 = vunpack.c.l.bf16 %v35
  %v52 = vunpack.c.l.bf16 %v36
  %v53 = vunpack.c.l.bf16 %v37
  %v54 = vunpack.c.l.bf16 %v38
  %v55 = vunpack.c.l.bf16 %v39
  %v56 = vld [vmem:[%s1] sm:$0xff]
  %v57 = vld [vmem:[%s1 + $0x8] sm:$0xff]
  %v58 = vld [vmem:[%s1 + $0x10] sm:$0xff]
  %v59 = vld [vmem:[%s1 + $0x18] sm:$0xff]
  %v60 = vld [vmem:[%s1 + $0x20] sm:$0xff]
  %v61 = vld [vmem:[%s1 + $0x28] sm:$0xff]
  %v62 = vld [vmem:[%s1 + $0x30] sm:$0xff]
  %v63 = vld [vmem:[%s1 + $0x38] sm:$0xff]
  %v64 = vld [vmem:[%s1 + $0x40] sm:$0xff]
  %v65 = vld [vmem:[%s1 + $0x48] sm:$0xff]
  %v66 = vld [vmem:[%s1 + $0x50] sm:$0xff]
  %v67 = vld [vmem:[%s1 + $0x58] sm:$0xff]
  %v68 = vld [vmem:[%s1 + $0x60] sm:$0xff]
  %v69 = vld [vmem:[%s1 + $0x68] sm:$0xff]
  %v70 = vld [vmem:[%s1 + $0x70] sm:$0xff]
  %v71 = vld [vmem:[%s1 + $0x78] sm:$0xff]
  %73 = vset.pattern.permute.xlu0 0
  %74 = vperm.xlu0 %73, %v56
  %v75 = vpop.permute.xlu0 %74
  %78 = vset.pattern.permute.xlu0 0
  %79 = vperm.xlu0 %78, %v57
  %v80 = vpop.permute.xlu0 %79
  %83 = vset.pattern.permute.xlu0 0
  %84 = vperm.xlu0 %83, %v58
  %v85 = vpop.permute.xlu0 %84
  %88 = vset.pattern.permute.xlu0 0
  %89 = vperm.xlu0 %88, %v59
  %v90 = vpop.permute.xlu0 %89
  %93 = vset.pattern.permute.xlu0 0
  %94 = vperm.xlu0 %93, %v60
  %v95 = vpop.permute.xlu0 %94
  %98 = vset.pattern.permute.xlu0 0
  %99 = vperm.xlu0 %98, %v61
  %v100 = vpop.permute.xlu0 %99
  %103 = vset.pattern.permute.xlu0 0
  %104 = vperm.xlu0 %103, %v62
  %v105 = vpop.permute.xlu0 %104
  %108 = vset.pattern.permute.xlu0 0
  %109 = vperm.xlu0 %108, %v63
  %v110 = vpop.permute.xlu0 %109
  %113 = vset.pattern.permute.xlu0 0
  %114 = vperm.xlu0 %113, %v64
  %v115 = vpop.permute.xlu0 %114
  %118 = vset.pattern.permute.xlu0 0
  %119 = vperm.xlu0 %118, %v65
  %v120 = vpop.permute.xlu0 %119
  %123 = vset.pattern.permute.xlu0 0
  %124 = vperm.xlu0 %123, %v66
  %v125 = vpop.permute.xlu0 %124
  %128 = vset.pattern.permute.xlu0 0
  %129 = vperm.xlu0 %128, %v67
  %v130 = vpop.permute.xlu0 %129
  %133 = vset.pattern.permute.xlu0 0
  %134 = vperm.xlu0 %133, %v68
  %v135 = vpop.permute.xlu0 %134
  %138 = vset.pattern.permute.xlu0 0
  %139 = vperm.xlu0 %138, %v69
  %v140 = vpop.permute.xlu0 %139
  %143 = vset.pattern.permute.xlu0 0
  %144 = vperm.xlu0 %143, %v70
  %v145 = vpop.permute.xlu0 %144
  %148 = vset.pattern.permute.xlu0 0
  %149 = vperm.xlu0 %148, %v71
  %v150 = vpop.permute.xlu0 %149
  %v152 = vmul.f32 %v40, %v75
  %v153 = vmul.f32 %v41, %v80
  %v154 = vmul.f32 %v42, %v85
  %v155 = vmul.f32 %v43, %v90
  %v156 = vmul.f32 %v44, %v95
  %v157 = vmul.f32 %v45, %v100
  %v158 = vmul.f32 %v46, %v105
  %v159 = vmul.f32 %v47, %v110
  %v160 = vmul.f32 %v48, %v115
  %v161 = vmul.f32 %v49, %v120
  %v162 = vmul.f32 %v50, %v125
  %v163 = vmul.f32 %v51, %v130
  %v164 = vmul.f32 %v52, %v135
  %v165 = vmul.f32 %v53, %v140
  %v166 = vmul.f32 %v54, %v145
  %v167 = vmul.f32 %v55, %v150
  %v168 = vpack.c.bf16 %v153, %v152
  %v169 = vpack.c.bf16 %v155, %v154
  %v170 = vpack.c.bf16 %v157, %v156
  %v171 = vpack.c.bf16 %v159, %v158
  %v172 = vpack.c.bf16 %v161, %v160
  %v173 = vpack.c.bf16 %v163, %v162
  %v174 = vpack.c.bf16 %v165, %v164
  %v175 = vpack.c.bf16 %v167, %v166
  %v176 = vld [vmem:[%s2] sm:$0xf]
  %v177 = vld [vmem:[%s2 + $0x4] sm:$0xf]
  %v178 = vld [vmem:[%s2 + $0x8] sm:$0xf]
  %v179 = vld [vmem:[%s2 + $0xc] sm:$0xf]
  %v180 = vld [vmem:[%s2 + $0x10] sm:$0xf]
  %v181 = vld [vmem:[%s2 + $0x14] sm:$0xf]
  %v182 = vld [vmem:[%s2 + $0x18] sm:$0xf]
  %v183 = vld [vmem:[%s2 + $0x1c] sm:$0xf]
  %v184 = vld [vmem:[%s2 + $0x20] sm:$0xf]
  %v185 = vld [vmem:[%s2 + $0x24] sm:$0xf]
  %v186 = vld [vmem:[%s2 + $0x28] sm:$0xf]
  %v187 = vld [vmem:[%s2 + $0x2c] sm:$0xf]
  %v188 = vld [vmem:[%s2 + $0x30] sm:$0xf]
  %v189 = vld [vmem:[%s2 + $0x34] sm:$0xf]
  %v190 = vld [vmem:[%s2 + $0x38] sm:$0xf]
  %v191 = vld [vmem:[%s2 + $0x3c] sm:$0xf]
  %v208 = vunpack.c.l.b16 %v176
  %v209 = vunpack.c.l.b16 %v177
  %v210 = vunpack.c.l.b16 %v178
  %v211 = vunpack.c.l.b16 %v179
  %v212 = vunpack.c.l.b16 %v180
  %v213 = vunpack.c.l.b16 %v181
  %v214 = vunpack.c.l.b16 %v182
  %v215 = vunpack.c.l.b16 %v183
  %v216 = vunpack.c.l.b16 %v184
  %v217 = vunpack.c.l.b16 %v185
  %v218 = vunpack.c.l.b16 %v186
  %v219 = vunpack.c.l.b16 %v187
  %v220 = vunpack.c.l.b16 %v188
  %v221 = vunpack.c.l.b16 %v189
  %v222 = vunpack.c.l.b16 %v190
  %v223 = vunpack.c.l.b16 %v191
  %v224 = vpack.c.b16 %v209, %v208
  %v225 = vpack.c.b16 %v211, %v210
  %v226 = vpack.c.b16 %v213, %v212
  %v227 = vpack.c.b16 %v215, %v214
  %v228 = vpack.c.b16 %v217, %v216
  %v229 = vpack.c.b16 %v219, %v218
  %v230 = vpack.c.b16 %v221, %v220
  %v231 = vpack.c.b16 %v223, %v222
  %240 = vmatprep.subr.bf16.mxu0 0
  %241 = vmatpush1.bf16.msra.mxu0 %v224
  %242 = vmatprep.subr.bf16.mxu0 0
  %243 = vmatpush1.bf16.msra.mxu0 %v225
  %244 = vmatprep.subr.bf16.mxu0 0
  %245 = vmatpush1.bf16.msra.mxu0 %v226
  %246 = vmatprep.subr.bf16.mxu0 0
  %247 = vmatpush1.bf16.msra.mxu0 %v227
  %248 = vmatprep.subr.bf16.mxu0 0
  %249 = vmatpush1.bf16.msra.mxu0 %v228
  %250 = vmatprep.subr.bf16.mxu0 0
  %251 = vmatpush1.bf16.msra.mxu0 %v229
  %252 = vmatprep.subr.bf16.mxu0 0
  %253 = vmatpush1.bf16.msra.mxu0 %v230
  %254 = vmatprep.subr.bf16.mxu0 0
  %255 = vmatpush1.bf16.msra.mxu0 %v231
  %256 = vmatprep.subr.bf16.mxu0 0
  %257 = vmatpush1.bf16.msra.mxu0 0
  %258 = vmatprep.subr.bf16.mxu0 0
  %259 = vmatpush1.bf16.msra.mxu0 0
  %260 = vmatprep.subr.bf16.mxu0 0
  %261 = vmatpush1.bf16.msra.mxu0 0
  %262 = vmatprep.subr.bf16.mxu0 0
  %263 = vmatpush1.bf16.msra.mxu0 0
  %264 = vmatprep.subr.bf16.mxu0 0
  %265 = vmatpush1.bf16.msra.mxu0 0
  %266 = vmatprep.subr.bf16.mxu0 0
  %267 = vmatpush1.bf16.msra.mxu0 0
  %268 = vmatprep.subr.bf16.mxu0 0
  %269 = vmatpush1.bf16.msra.mxu0 0
  %270 = vmatprep.subr.bf16.mxu0 0
  %271 = vmatpush1.bf16.msra.mxu0 0
  %272 = vmatprep.mubr.bf16.mxu0 0
  %273 = vmatmul.mubr.bf16.gmra.mrb[0].mxu0 %v168
  %v274 = vpop.f32.mrb[0].mxu0
  %v275 = vadd.f32 0.0, %v274
  %v276 = vpop.f32.mrb[0].mxu0
  %v277 = vpop.f32.mrb[0].mxu0
  %v278 = vadd.f32 0.0, %v277
  %v279 = vpop.f32.mrb[0].mxu0
  %280 = vmatprep.mubr.bf16.mxu0 0
  %281 = vmatmul.mubr.bf16.gmra.mrb[0].mxu0 %v169
  %v282 = vpop.f32.mrb[0].mxu0
  %v283 = vadd.f32 0.0, %v282
  %v284 = vpop.f32.mrb[0].mxu0
  %v285 = vpop.f32.mrb[0].mxu0
  %v286 = vadd.f32 0.0, %v285
  %v287 = vpop.f32.mrb[0].mxu0
  %288 = vmatprep.mubr.bf16.mxu0 0
  %289 = vmatmul.mubr.bf16.gmra.mrb[0].mxu0 %v170
  %v290 = vpop.f32.mrb[0].mxu0
  %v291 = vadd.f32 0.0, %v290
  %v292 = vpop.f32.mrb[0].mxu0
  %v293 = vpop.f32.mrb[0].mxu0
  %v294 = vadd.f32 0.0, %v293
  %v295 = vpop.f32.mrb[0].mxu0
  %296 = vmatprep.mubr.bf16.mxu0 0
  %297 = vmatmul.mubr.bf16.gmra.mrb[0].mxu0 %v171
  %v298 = vpop.f32.mrb[0].mxu0
  %v299 = vadd.f32 0.0, %v298
  %v300 = vpop.f32.mrb[0].mxu0
  %v301 = vpop.f32.mrb[0].mxu0
  %v302 = vadd.f32 0.0, %v301
  %v303 = vpop.f32.mrb[0].mxu0
  %304 = vmatprep.mubr.bf16.mxu0 0
  %305 = vmatmul.mubr.bf16.gmra.mrb[0].mxu0 %v172
  %v306 = vpop.f32.mrb[0].mxu0
  %v307 = vadd.f32 0.0, %v306
  %v308 = vpop.f32.mrb[0].mxu0
  %v309 = vpop.f32.mrb[0].mxu0
  %v310 = vadd.f32 0.0, %v309
  %v311 = vpop.f32.mrb[0].mxu0
  %312 = vmatprep.mubr.bf16.mxu0 0
  %313 = vmatmul.mubr.bf16.gmra.mrb[0].mxu0 %v173
  %v314 = vpop.f32.mrb[0].mxu0
  %v315 = vadd.f32 0.0, %v314
  %v316 = vpop.f32.mrb[0].mxu0
  %v317 = vpop.f32.mrb[0].mxu0
  %v318 = vadd.f32 0.0, %v317
  %v319 = vpop.f32.mrb[0].mxu0
  %320 = vmatprep.mubr.bf16.mxu0 0
  %321 = vmatmul.mubr.bf16.gmra.mrb[0].mxu0 %v174
  %v322 = vpop.f32.mrb[0].mxu0
  %v323 = vadd.f32 0.0, %v322
  %v324 = vpop.f32.mrb[0].mxu0
  %v325 = vpop.f32.mrb[0].mxu0
  %v326 = vadd.f32 0.0, %v325
  %v327 = vpop.f32.mrb[0].mxu0
  %328 = vmatprep.mubr.bf16.mxu0 0
  %329 = vmatmul.mubr.bf16.gmra.mrb[0].mxu0 %v175
  %v330 = vpop.f32.mrb[0].mxu0
  %v331 = vadd.f32 0.0, %v330
  %v332 = vpop.f32.mrb[0].mxu0
  %v333 = vpop.f32.mrb[0].mxu0
  %v334 = vadd.f32 0.0, %v333
  %v335 = vpop.f32.mrb[0].mxu0
  %336 = vdwg.mxu0
  %v337 = vpack.c.bf16 %v278, %v275
  %v338 = vpack.c.bf16 %v286, %v283
  %v339 = vpack.c.bf16 %v294, %v291
  %v340 = vpack.c.bf16 %v302, %v299
  %v341 = vpack.c.bf16 %v310, %v307
  %v342 = vpack.c.bf16 %v318, %v315
  %v343 = vpack.c.bf16 %v326, %v323
  %v344 = vpack.c.bf16 %v334, %v331
  %v345 = vld [vmem:[%s3] sm:$0xf]
  %v346 = vld [vmem:[%s3 + $0x4] sm:$0xf]
  %v347 = vld [vmem:[%s3 + $0x8] sm:$0xf]
  %v348 = vld [vmem:[%s3 + $0xc] sm:$0xf]
  %v349 = vld [vmem:[%s3 + $0x10] sm:$0xf]
  %v350 = vld [vmem:[%s3 + $0x14] sm:$0xf]
  %v351 = vld [vmem:[%s3 + $0x18] sm:$0xf]
  %v352 = vld [vmem:[%s3 + $0x1c] sm:$0xf]
  %v353 = vld [vmem:[%s3 + $0x20] sm:$0xf]
  %v354 = vld [vmem:[%s3 + $0x24] sm:$0xf]
  %v355 = vld [vmem:[%s3 + $0x28] sm:$0xf]
  %v356 = vld [vmem:[%s3 + $0x2c] sm:$0xf]
  %v357 = vld [vmem:[%s3 + $0x30] sm:$0xf]
  %v358 = vld [vmem:[%s3 + $0x34] sm:$0xf]
  %v359 = vld [vmem:[%s3 + $0x38] sm:$0xf]
  %v360 = vld [vmem:[%s3 + $0x3c] sm:$0xf]
  %v377 = vunpack.c.l.b16 %v345
  %v378 = vunpack.c.l.b16 %v346
  %v379 = vunpack.c.l.b16 %v347
  %v380 = vunpack.c.l.b16 %v348
  %v381 = vunpack.c.l.b16 %v349
  %v382 = vunpack.c.l.b16 %v350
  %v383 = vunpack.c.l.b16 %v351
  %v384 = vunpack.c.l.b16 %v352
  %v385 = vunpack.c.l.b16 %v353
  %v386 = vunpack.c.l.b16 %v354
  %v387 = vunpack.c.l.b16 %v355
  %v388 = vunpack.c.l.b16 %v356
  %v389 = vunpack.c.l.b16 %v357
  %v390 = vunpack.c.l.b16 %v358
  %v391 = vunpack.c.l.b16 %v359
  %v392 = vunpack.c.l.b16 %v360
  %v393 = vpack.c.b16 %v378, %v377
  %v394 = vpack.c.b16 %v380, %v379
  %v395 = vpack.c.b16 %v382, %v381
  %v396 = vpack.c.b16 %v384, %v383
  %v397 = vpack.c.b16 %v386, %v385
  %v398 = vpack.c.b16 %v388, %v387
  %v399 = vpack.c.b16 %v390, %v389
  %v400 = vpack.c.b16 %v392, %v391
  %409 = vmatprep.subr.bf16.mxu0 0
  %410 = vmatpush1.bf16.msra.mxu0 %v337
  %411 = vmatprep.subr.bf16.mxu0 0
  %412 = vmatpush1.bf16.msra.mxu0 %v338
  %413 = vmatprep.subr.bf16.mxu0 0
  %414 = vmatpush1.bf16.msra.mxu0 %v339
  %415 = vmatprep.subr.bf16.mxu0 0
  %416 = vmatpush1.bf16.msra.mxu0 %v340
  %417 = vmatprep.subr.bf16.mxu0 0
  %418 = vmatpush1.bf16.msra.mxu0 %v341
  %419 = vmatprep.subr.bf16.mxu0 0
  %420 = vmatpush1.bf16.msra.mxu0 %v342
  %421 = vmatprep.subr.bf16.mxu0 0
  %422 = vmatpush1.bf16.msra.mxu0 %v343
  %423 = vmatprep.subr.bf16.mxu0 0
  %424 = vmatpush1.bf16.msra.mxu0 %v344
  %425 = vmatprep.subr.bf16.mxu0 0
  %426 = vmatpush1.bf16.msra.mxu0 0
  %427 = vmatprep.subr.bf16.mxu0 0
  %428 = vmatpush1.bf16.msra.mxu0 0
  %429 = vmatprep.subr.bf16.mxu0 0
  %430 = vmatpush1.bf16.msra.mxu0 0
  %431 = vmatprep.subr.bf16.mxu0 0
  %432 = vmatpush1.bf16.msra.mxu0 0
  %433 = vmatprep.subr.bf16.mxu0 0
  %434 = vmatpush1.bf16.msra.mxu0 0
  %435 = vmatprep.subr.bf16.mxu0 0
  %436 = vmatpush1.bf16.msra.mxu0 0
  %437 = vmatprep.subr.bf16.mxu0 0
  %438 = vmatpush1.bf16.msra.mxu0 0
  %439 = vmatprep.subr.bf16.mxu0 0
  %440 = vmatpush1.bf16.msra.mxu0 0
  %441 = vmatprep.mubr.bf16.mxu0 0
  %442 = vmatmul.mubr.bf16.gmra.mrb[0].mxu0 %v393
  %v443 = vpop.f32.mrb[0].mxu0
  %v444 = vadd.f32 0.0, %v443
  %v445 = vpop.f32.mrb[0].mxu0
  %v446 = vpop.f32.mrb[0].mxu0
  %v447 = vadd.f32 0.0, %v446
  %v448 = vpop.f32.mrb[0].mxu0
  %449 = vmatprep.mubr.bf16.mxu0 0
  %450 = vmatmul.mubr.bf16.gmra.mrb[0].mxu0 %v394
  %v451 = vpop.f32.mrb[0].mxu0
  %v452 = vadd.f32 0.0, %v451
  %v453 = vpop.f32.mrb[0].mxu0
  %v454 = vpop.f32.mrb[0].mxu0
  %v455 = vadd.f32 0.0, %v454
  %v456 = vpop.f32.mrb[0].mxu0
  %457 = vmatprep.mubr.bf16.mxu0 0
  %458 = vmatmul.mubr.bf16.gmra.mrb[0].mxu0 %v395
  %v459 = vpop.f32.mrb[0].mxu0
  %v460 = vadd.f32 0.0, %v459
  %v461 = vpop.f32.mrb[0].mxu0
  %v462 = vpop.f32.mrb[0].mxu0
  %v463 = vadd.f32 0.0, %v462
  %v464 = vpop.f32.mrb[0].mxu0
  %465 = vmatprep.mubr.bf16.mxu0 0
  %466 = vmatmul.mubr.bf16.gmra.mrb[0].mxu0 %v396
  %v467 = vpop.f32.mrb[0].mxu0
  %v468 = vadd.f32 0.0, %v467
  %v469 = vpop.f32.mrb[0].mxu0
  %v470 = vpop.f32.mrb[0].mxu0
  %v471 = vadd.f32 0.0, %v470
  %v472 = vpop.f32.mrb[0].mxu0
  %473 = vmatprep.mubr.bf16.mxu0 0
  %474 = vmatmul.mubr.bf16.gmra.mrb[0].mxu0 %v397
  %v475 = vpop.f32.mrb[0].mxu0
  %v476 = vadd.f32 0.0, %v475
  %v477 = vpop.f32.mrb[0].mxu0
  %v478 = vpop.f32.mrb[0].mxu0
  %v479 = vadd.f32 0.0, %v478
  %v480 = vpop.f32.mrb[0].mxu0
  %481 = vmatprep.mubr.bf16.mxu0 0
  %482 = vmatmul.mubr.bf16.gmra.mrb[0].mxu0 %v398
  %v483 = vpop.f32.mrb[0].mxu0
  %v484 = vadd.f32 0.0, %v483
  %v485 = vpop.f32.mrb[0].mxu0
  %v486 = vpop.f32.mrb[0].mxu0
  %v487 = vadd.f32 0.0, %v486
  %v488 = vpop.f32.mrb[0].mxu0
  %489 = vmatprep.mubr.bf16.mxu0 0
  %490 = vmatmul.mubr.bf16.gmra.mrb[0].mxu0 %v399
  %v491 = vpop.f32.mrb[0].mxu0
  %v492 = vadd.f32 0.0, %v491
  %v493 = vpop.f32.mrb[0].mxu0
  %v494 = vpop.f32.mrb[0].mxu0
  %v495 = vadd.f32 0.0, %v494
  %v496 = vpop.f32.mrb[0].mxu0
  %497 = vmatprep.mubr.bf16.mxu0 0
  %498 = vmatmul.mubr.bf16.gmra.mrb[0].mxu0 %v400
  %v499 = vpop.f32.mrb[0].mxu0
  %v500 = vadd.f32 0.0, %v499
  %v501 = vpop.f32.mrb[0].mxu0
  %v502 = vpop.f32.mrb[0].mxu0
  %v503 = vadd.f32 0.0, %v502
  %v504 = vpop.f32.mrb[0].mxu0
  %505 = vdwg.mxu0
  %v506 = vld [vmem:[%s4] sm:$0xff]
  %v507 = vld [vmem:[%s4 + $0x8] sm:$0xff]
  %v508 = vld [vmem:[%s4 + $0x10] sm:$0xff]
  %v509 = vld [vmem:[%s4 + $0x18] sm:$0xff]
  %v510 = vld [vmem:[%s4 + $0x20] sm:$0xff]
  %v511 = vld [vmem:[%s4 + $0x28] sm:$0xff]
  %v512 = vld [vmem:[%s4 + $0x30] sm:$0xff]
  %v513 = vld [vmem:[%s4 + $0x38] sm:$0xff]
  %v514 = vld [vmem:[%s4 + $0x40] sm:$0xff]
  %v515 = vld [vmem:[%s4 + $0x48] sm:$0xff]
  %v516 = vld [vmem:[%s4 + $0x50] sm:$0xff]
  %v517 = vld [vmem:[%s4 + $0x58] sm:$0xff]
  %v518 = vld [vmem:[%s4 + $0x60] sm:$0xff]
  %v519 = vld [vmem:[%s4 + $0x68] sm:$0xff]
  %v520 = vld [vmem:[%s4 + $0x70] sm:$0xff]
  %v521 = vld [vmem:[%s4 + $0x78] sm:$0xff]
  %523 = vset.pattern.permute.xlu0 0
  %524 = vperm.xlu0 %523, %v506
  %v525 = vpop.permute.xlu0 %524
  %528 = vset.pattern.permute.xlu0 0
  %529 = vperm.xlu0 %528, %v507
  %v530 = vpop.permute.xlu0 %529
  %533 = vset.pattern.permute.xlu0 0
  %534 = vperm.xlu0 %533, %v508
  %v535 = vpop.permute.xlu0 %534
  %538 = vset.pattern.permute.xlu0 0
  %539 = vperm.xlu0 %538, %v509
  %v540 = vpop.permute.xlu0 %539
  %543 = vset.pattern.permute.xlu0 0
  %544 = vperm.xlu0 %543, %v510
  %v545 = vpop.permute.xlu0 %544
  %548 = vset.pattern.permute.xlu0 0
  %549 = vperm.xlu0 %548, %v511
  %v550 = vpop.permute.xlu0 %549
  %553 = vset.pattern.permute.xlu0 0
  %554 = vperm.xlu0 %553, %v512
  %v555 = vpop.permute.xlu0 %554
  %558 = vset.pattern.permute.xlu0 0
  %559 = vperm.xlu0 %558, %v513
  %v560 = vpop.permute.xlu0 %559
  %563 = vset.pattern.permute.xlu0 0
  %564 = vperm.xlu0 %563, %v514
  %v565 = vpop.permute.xlu0 %564
  %568 = vset.pattern.permute.xlu0 0
  %569 = vperm.xlu0 %568, %v515
  %v570 = vpop.permute.xlu0 %569
  %573 = vset.pattern.permute.xlu0 0
  %574 = vperm.xlu0 %573, %v516
  %v575 = vpop.permute.xlu0 %574
  %578 = vset.pattern.permute.xlu0 0
  %579 = vperm.xlu0 %578, %v517
  %v580 = vpop.permute.xlu0 %579
  %583 = vset.pattern.permute.xlu0 0
  %584 = vperm.xlu0 %583, %v518
  %v585 = vpop.permute.xlu0 %584
  %588 = vset.pattern.permute.xlu0 0
  %589 = vperm.xlu0 %588, %v519
  %v590 = vpop.permute.xlu0 %589
  %593 = vset.pattern.permute.xlu0 0
  %594 = vperm.xlu0 %593, %v520
  %v595 = vpop.permute.xlu0 %594
  %598 = vset.pattern.permute.xlu0 0
  %599 = vperm.xlu0 %598, %v521
  %v600 = vpop.permute.xlu0 %599
  %v602 = vmul.f32 %v444, %v525
  %v603 = vmul.f32 %v447, %v530
  %v604 = vmul.f32 %v452, %v535
  %v605 = vmul.f32 %v455, %v540
  %v606 = vmul.f32 %v460, %v545
  %v607 = vmul.f32 %v463, %v550
  %v608 = vmul.f32 %v468, %v555
  %v609 = vmul.f32 %v471, %v560
  %v610 = vmul.f32 %v476, %v565
  %v611 = vmul.f32 %v479, %v570
  %v612 = vmul.f32 %v484, %v575
  %v613 = vmul.f32 %v487, %v580
  %v614 = vmul.f32 %v492, %v585
  %v615 = vmul.f32 %v495, %v590
  %v616 = vmul.f32 %v500, %v595
  %v617 = vmul.f32 %v503, %v600
  %v618 = vld [vmem:[%s5] sm:$0x1]
  %v620 = vlaneseq
  %v621 = vshrl.u32 %v620, 7
  %v622 = vsub.s32 0, %v621
  %v623 = vrot.slane %v618, %v622
  %v625 = vadd.f32 %v602, %v623
  %v626 = vadd.f32 %v603, %v623
  %v627 = vadd.f32 %v604, %v623
  %v628 = vadd.f32 %v605, %v623
  %v629 = vadd.f32 %v606, %v623
  %v630 = vadd.f32 %v607, %v623
  %v631 = vadd.f32 %v608, %v623
  %v632 = vadd.f32 %v609, %v623
  %v633 = vadd.f32 %v610, %v623
  %v634 = vadd.f32 %v611, %v623
  %v635 = vadd.f32 %v612, %v623
  %v636 = vadd.f32 %v613, %v623
  %v637 = vadd.f32 %v614, %v623
  %v638 = vadd.f32 %v615, %v623
  %v639 = vadd.f32 %v616, %v623
  %v640 = vadd.f32 %v617, %v623
  %641 = vst [vmem:[%s6] sm:$0xff] %v625
  %642 = vst [vmem:[%s6 + $0x8] sm:$0xff] %v626
  %643 = vst [vmem:[%s6 + $0x10] sm:$0xff] %v627
  %644 = vst [vmem:[%s6 + $0x18] sm:$0xff] %v628
  %645 = vst [vmem:[%s6 + $0x20] sm:$0xff] %v629
  %646 = vst [vmem:[%s6 + $0x28] sm:$0xff] %v630
  %647 = vst [vmem:[%s6 + $0x30] sm:$0xff] %v631
  %648 = vst [vmem:[%s6 + $0x38] sm:$0xff] %v632
  %649 = vst [vmem:[%s6 + $0x40] sm:$0xff] %v633
  %650 = vst [vmem:[%s6 + $0x48] sm:$0xff] %v634
  %651 = vst [vmem:[%s6 + $0x50] sm:$0xff] %v635
  %652 = vst [vmem:[%s6 + $0x58] sm:$0xff] %v636
  %653 = vst [vmem:[%s6 + $0x60] sm:$0xff] %v637
  %654 = vst [vmem:[%s6 + $0x68] sm:$0xff] %v638
  %655 = vst [vmem:[%s6 + $0x70] sm:$0xff] %v639
  %656 = vst [vmem:[%s6 + $0x78] sm:$0xff] %v640
  // Predicated region
  $region26: #{gcn_forward.3} parent=0 // pred_check
    _
  $region27: #{gcn_forward.3} parent=0 // pred_check_branch
    %658 = sbr.rel (0) target = $region29
  $region28: #{gcn_forward.3} parent=0 // pred_region
    _
  $region29: #{gcn_forward.3} parent=0 // pred_fallthru
    _
  // Predicated region
  $region30: #{gcn_forward.3} parent=0 // pred_check
    _
  $region31: #{gcn_forward.3} parent=0 // pred_check_branch
    %660 = sbr.rel (0) target = $region33
  $region32: #{gcn_forward.3} parent=0 // pred_region
    _
  $region33: #{gcn_forward.3} parent=0 // pred_fallthru
    _

// kernel: gcn_forward.2
$region0: #{gcn_forward.2}
  #allocation0 [shape = 'u32[]', space=smem, size = 0x4, offset = 0x4, fixed_abs, tag = 'smem constant byte address 0x4 - core index']
  #allocation1 [shape = 'u32[144,128]{1,0:T(1,128)}', space=vmem, size = 0x12000, scoped, tag = 'internal scratch']
  %s0 = inlined_call_operand.vmem [shape: bf16[128,128], index: 0, kind: input, shape index: {}]
  %s1 = inlined_call_operand.vmem [shape: f32[128,1], index: 1, kind: input, shape index: {}]
  %s2 = inlined_call_operand.vmem [shape: bf16[128,128], index: 2, kind: input, shape index: {}]
  %s3 = inlined_call_operand.vmem [shape: bf16[128,128], index: 3, kind: input, shape index: {}]
  %s4 = inlined_call_operand.vmem [shape: f32[128,1], index: 4, kind: input, shape index: {}]
  %s5 = inlined_call_operand.vmem [shape: f32[1,128], index: 5, kind: input, shape index: {}]
  %s6 = inlined_call_operand.vmem [shape: bf16[128,128], index: 6, kind: output, shape index: {}]
  %s7 = sld [smem:[#allocation0]]
  $region34: #{gcn_forward.2} parent=0
    _
  %s9 = ssub.s32 1, %s7
  %s10 = scalar_select 0, %s9, %s7
  // Predicated region
  $region2: #{gcn_forward.2} parent=0 // pred_check
    _
  $region3: #{gcn_forward.2} parent=0 // pred_check_branch
    %12 = sbr.rel (0) target = $region5
  $region4: #{gcn_forward.2} parent=0 // pred_region
    _
  $region5: #{gcn_forward.2} parent=0 // pred_fallthru
    _
  // Predicated region
  $region6: #{gcn_forward.2} parent=0 // pred_check
    _
  $region7: #{gcn_forward.2} parent=0 // pred_check_branch
    %14 = sbr.rel (0) target = $region9
  $region8: #{gcn_forward.2} parent=0 // pred_region
    _
  $region9: #{gcn_forward.2} parent=0 // pred_fallthru
    _
  // Predicated region
  $region10: #{gcn_forward.2} parent=0 // pred_check
    _
  $region11: #{gcn_forward.2} parent=0 // pred_check_branch
    %16 = sbr.rel (0) target = $region13
  $region12: #{gcn_forward.2} parent=0 // pred_region
    _
  $region13: #{gcn_forward.2} parent=0 // pred_fallthru
    _
  // Predicated region
  $region14: #{gcn_forward.2} parent=0 // pred_check
    _
  $region15: #{gcn_forward.2} parent=0 // pred_check_branch
    %18 = sbr.rel (0) target = $region17
  $region16: #{gcn_forward.2} parent=0 // pred_region
    _
  $region17: #{gcn_forward.2} parent=0 // pred_fallthru
    _
  // Predicated region
  $region18: #{gcn_forward.2} parent=0 // pred_check
    _
  $region19: #{gcn_forward.2} parent=0 // pred_check_branch
    %20 = sbr.rel (0) target = $region21
  $region20: #{gcn_forward.2} parent=0 // pred_region
    _
  $region21: #{gcn_forward.2} parent=0 // pred_fallthru
    _
  // Predicated region
  $region22: #{gcn_forward.2} parent=0 // pred_check
    _
  $region23: #{gcn_forward.2} parent=0 // pred_check_branch
    %22 = sbr.rel (0) target = $region25
  $region24: #{gcn_forward.2} parent=0 // pred_region
    _
  $region25: #{gcn_forward.2} parent=0 // pred_fallthru
    _
  %v24 = vld [vmem:[%s0] sm:$0xf]
  %v25 = vld [vmem:[%s0 + $0x4] sm:$0xf]
  %v26 = vld [vmem:[%s0 + $0x8] sm:$0xf]
  %v27 = vld [vmem:[%s0 + $0xc] sm:$0xf]
  %v28 = vld [vmem:[%s0 + $0x10] sm:$0xf]
  %v29 = vld [vmem:[%s0 + $0x14] sm:$0xf]
  %v30 = vld [vmem:[%s0 + $0x18] sm:$0xf]
  %v31 = vld [vmem:[%s0 + $0x1c] sm:$0xf]
  %v32 = vld [vmem:[%s0 + $0x20] sm:$0xf]
  %v33 = vld [vmem:[%s0 + $0x24] sm:$0xf]
  %v34 = vld [vmem:[%s0 + $0x28] sm:$0xf]
  %v35 = vld [vmem:[%s0 + $0x2c] sm:$0xf]
  %v36 = vld [vmem:[%s0 + $0x30] sm:$0xf]
  %v37 = vld [vmem:[%s0 + $0x34] sm:$0xf]
  %v38 = vld [vmem:[%s0 + $0x38] sm:$0xf]
  %v39 = vld [vmem:[%s0 + $0x3c] sm:$0xf]
  %v40 = vunpack.c.l.bf16 %v24
  %v41 = vunpack.c.l.bf16 %v25
  %v42 = vunpack.c.l.bf16 %v26
  %v43 = vunpack.c.l.bf16 %v27
  %v44 = vunpack.c.l.bf16 %v28
  %v45 = vunpack.c.l.bf16 %v29
  %v46 = vunpack.c.l.bf16 %v30
  %v47 = vunpack.c.l.bf16 %v31
  %v48 = vunpack.c.l.bf16 %v32
  %v49 = vunpack.c.l.bf16 %v33
  %v50 = vunpack.c.l.bf16 %v34
  %v51 = vunpack.c.l.bf16 %v35
  %v52 = vunpack.c.l.bf16 %v36
  %v53 = vunpack.c.l.bf16 %v37
  %v54 = vunpack.c.l.bf16 %v38
  %v55 = vunpack.c.l.bf16 %v39
  %v56 = vld [vmem:[%s1] sm:$0xff]
  %v57 = vld [vmem:[%s1 + $0x8] sm:$0xff]
  %v58 = vld [vmem:[%s1 + $0x10] sm:$0xff]
  %v59 = vld [vmem:[%s1 + $0x18] sm:$0xff]
  %v60 = vld [vmem:[%s1 + $0x20] sm:$0xff]
  %v61 = vld [vmem:[%s1 + $0x28] sm:$0xff]
  %v62 = vld [vmem:[%s1 + $0x30] sm:$0xff]
  %v63 = vld [vmem:[%s1 + $0x38] sm:$0xff]
  %v64 = vld [vmem:[%s1 + $0x40] sm:$0xff]
  %v65 = vld [vmem:[%s1 + $0x48] sm:$0xff]
  %v66 = vld [vmem:[%s1 + $0x50] sm:$0xff]
  %v67 = vld [vmem:[%s1 + $0x58] sm:$0xff]
  %v68 = vld [vmem:[%s1 + $0x60] sm:$0xff]
  %v69 = vld [vmem:[%s1 + $0x68] sm:$0xff]
  %v70 = vld [vmem:[%s1 + $0x70] sm:$0xff]
  %v71 = vld [vmem:[%s1 + $0x78] sm:$0xff]
  %73 = vset.pattern.permute.xlu0 0
  %74 = vperm.xlu0 %73, %v56
  %v75 = vpop.permute.xlu0 %74
  %78 = vset.pattern.permute.xlu0 0
  %79 = vperm.xlu0 %78, %v57
  %v80 = vpop.permute.xlu0 %79
  %83 = vset.pattern.permute.xlu0 0
  %84 = vperm.xlu0 %83, %v58
  %v85 = vpop.permute.xlu0 %84
  %88 = vset.pattern.permute.xlu0 0
  %89 = vperm.xlu0 %88, %v59
  %v90 = vpop.permute.xlu0 %89
  %93 = vset.pattern.permute.xlu0 0
  %94 = vperm.xlu0 %93, %v60
  %v95 = vpop.permute.xlu0 %94
  %98 = vset.pattern.permute.xlu0 0
  %99 = vperm.xlu0 %98, %v61
  %v100 = vpop.permute.xlu0 %99
  %103 = vset.pattern.permute.xlu0 0
  %104 = vperm.xlu0 %103, %v62
  %v105 = vpop.permute.xlu0 %104
  %108 = vset.pattern.permute.xlu0 0
  %109 = vperm.xlu0 %108, %v63
  %v110 = vpop.permute.xlu0 %109
  %113 = vset.pattern.permute.xlu0 0
  %114 = vperm.xlu0 %113, %v64
  %v115 = vpop.permute.xlu0 %114
  %118 = vset.pattern.permute.xlu0 0
  %119 = vperm.xlu0 %118, %v65
  %v120 = vpop.permute.xlu0 %119
  %123 = vset.pattern.permute.xlu0 0
  %124 = vperm.xlu0 %123, %v66
  %v125 = vpop.permute.xlu0 %124
  %128 = vset.pattern.permute.xlu0 0
  %129 = vperm.xlu0 %128, %v67
  %v130 = vpop.permute.xlu0 %129
  %133 = vset.pattern.permute.xlu0 0
  %134 = vperm.xlu0 %133, %v68
  %v135 = vpop.permute.xlu0 %134
  %138 = vset.pattern.permute.xlu0 0
  %139 = vperm.xlu0 %138, %v69
  %v140 = vpop.permute.xlu0 %139
  %143 = vset.pattern.permute.xlu0 0
  %144 = vperm.xlu0 %143, %v70
  %v145 = vpop.permute.xlu0 %144
  %148 = vset.pattern.permute.xlu0 0
  %149 = vperm.xlu0 %148, %v71
  %v150 = vpop.permute.xlu0 %149
  %v152 = vmul.f32 %v40, %v75
  %v153 = vmul.f32 %v41, %v80
  %v154 = vmul.f32 %v42, %v85
  %v155 = vmul.f32 %v43, %v90
  %v156 = vmul.f32 %v44, %v95
  %v157 = vmul.f32 %v45, %v100
  %v158 = vmul.f32 %v46, %v105
  %v159 = vmul.f32 %v47, %v110
  %v160 = vmul.f32 %v48, %v115
  %v161 = vmul.f32 %v49, %v120
  %v162 = vmul.f32 %v50, %v125
  %v163 = vmul.f32 %v51, %v130
  %v164 = vmul.f32 %v52, %v135
  %v165 = vmul.f32 %v53, %v140
  %v166 = vmul.f32 %v54, %v145
  %v167 = vmul.f32 %v55, %v150
  %v168 = vpack.c.bf16 %v153, %v152
  %v169 = vpack.c.bf16 %v155, %v154
  %v170 = vpack.c.bf16 %v157, %v156
  %v171 = vpack.c.bf16 %v159, %v158
  %v172 = vpack.c.bf16 %v161, %v160
  %v173 = vpack.c.bf16 %v163, %v162
  %v174 = vpack.c.bf16 %v165, %v164
  %v175 = vpack.c.bf16 %v167, %v166
  %v176 = vld [vmem:[%s2] sm:$0xf]
  %v177 = vld [vmem:[%s2 + $0x4] sm:$0xf]
  %v178 = vld [vmem:[%s2 + $0x8] sm:$0xf]
  %v179 = vld [vmem:[%s2 + $0xc] sm:$0xf]
  %v180 = vld [vmem:[%s2 + $0x10] sm:$0xf]
  %v181 = vld [vmem:[%s2 + $0x14] sm:$0xf]
  %v182 = vld [vmem:[%s2 + $0x18] sm:$0xf]
  %v183 = vld [vmem:[%s2 + $0x1c] sm:$0xf]
  %v184 = vld [vmem:[%s2 + $0x20] sm:$0xf]
  %v185 = vld [vmem:[%s2 + $0x24] sm:$0xf]
  %v186 = vld [vmem:[%s2 + $0x28] sm:$0xf]
  %v187 = vld [vmem:[%s2 + $0x2c] sm:$0xf]
  %v188 = vld [vmem:[%s2 + $0x30] sm:$0xf]
  %v189 = vld [vmem:[%s2 + $0x34] sm:$0xf]
  %v190 = vld [vmem:[%s2 + $0x38] sm:$0xf]
  %v191 = vld [vmem:[%s2 + $0x3c] sm:$0xf]
  %v208 = vunpack.c.l.b16 %v176
  %v209 = vunpack.c.l.b16 %v177
  %v210 = vunpack.c.l.b16 %v178
  %v211 = vunpack.c.l.b16 %v179
  %v212 = vunpack.c.l.b16 %v180
  %v213 = vunpack.c.l.b16 %v181
  %v214 = vunpack.c.l.b16 %v182
  %v215 = vunpack.c.l.b16 %v183
  %v216 = vunpack.c.l.b16 %v184
  %v217 = vunpack.c.l.b16 %v185
  %v218 = vunpack.c.l.b16 %v186
  %v219 = vunpack.c.l.b16 %v187
  %v220 = vunpack.c.l.b16 %v188
  %v221 = vunpack.c.l.b16 %v189
  %v222 = vunpack.c.l.b16 %v190
  %v223 = vunpack.c.l.b16 %v191
  %v224 = vpack.c.b16 %v209, %v208
  %v225 = vpack.c.b16 %v211, %v210
  %v226 = vpack.c.b16 %v213, %v212
  %v227 = vpack.c.b16 %v215, %v214
  %v228 = vpack.c.b16 %v217, %v216
  %v229 = vpack.c.b16 %v219, %v218
  %v230 = vpack.c.b16 %v221, %v220
  %v231 = vpack.c.b16 %v223, %v222
  %240 = vmatprep.subr.bf16.mxu0 0
  %241 = vmatpush1.bf16.msra.mxu0 %v224
  %242 = vmatprep.subr.bf16.mxu0 0
  %243 = vmatpush1.bf16.msra.mxu0 %v225
  %244 = vmatprep.subr.bf16.mxu0 0
  %245 = vmatpush1.bf16.msra.mxu0 %v226
  %246 = vmatprep.subr.bf16.mxu0 0
  %247 = vmatpush1.bf16.msra.mxu0 %v227
  %248 = vmatprep.subr.bf16.mxu0 0
  %249 = vmatpush1.bf16.msra.mxu0 %v228
  %250 = vmatprep.subr.bf16.mxu0 0
  %251 = vmatpush1.bf16.msra.mxu0 %v229
  %252 = vmatprep.subr.bf16.mxu0 0
  %253 = vmatpush1.bf16.msra.mxu0 %v230
  %254 = vmatprep.subr.bf16.mxu0 0
  %255 = vmatpush1.bf16.msra.mxu0 %v231
  %256 = vmatprep.subr.bf16.mxu0 0
  %257 = vmatpush1.bf16.msra.mxu0 0
  %258 = vmatprep.subr.bf16.mxu0 0
  %259 = vmatpush1.bf16.msra.mxu0 0
  %260 = vmatprep.subr.bf16.mxu0 0
  %261 = vmatpush1.bf16.msra.mxu0 0
  %262 = vmatprep.subr.bf16.mxu0 0
  %263 = vmatpush1.bf16.msra.mxu0 0
  %264 = vmatprep.subr.bf16.mxu0 0
  %265 = vmatpush1.bf16.msra.mxu0 0
  %266 = vmatprep.subr.bf16.mxu0 0
  %267 = vmatpush1.bf16.msra.mxu0 0
  %268 = vmatprep.subr.bf16.mxu0 0
  %269 = vmatpush1.bf16.msra.mxu0 0
  %270 = vmatprep.subr.bf16.mxu0 0
  %271 = vmatpush1.bf16.msra.mxu0 0
  %272 = vmatprep.mubr.bf16.mxu0 0
  %273 = vmatmul.mubr.bf16.gmra.mrb[0].mxu0 %v168
  %v274 = vpop.f32.mrb[0].mxu0
  %v275 = vadd.f32 0.0, %v274
  %v276 = vpop.f32.mrb[0].mxu0
  %v277 = vpop.f32.mrb[0].mxu0
  %v278 = vadd.f32 0.0, %v277
  %v279 = vpop.f32.mrb[0].mxu0
  %280 = vmatprep.mubr.bf16.mxu0 0
  %281 = vmatmul.mubr.bf16.gmra.mrb[0].mxu0 %v169
  %v282 = vpop.f32.mrb[0].mxu0
  %v283 = vadd.f32 0.0, %v282
  %v284 = vpop.f32.mrb[0].mxu0
  %v285 = vpop.f32.mrb[0].mxu0
  %v286 = vadd.f32 0.0, %v285
  %v287 = vpop.f32.mrb[0].mxu0
  %288 = vmatprep.mubr.bf16.mxu0 0
  %289 = vmatmul.mubr.bf16.gmra.mrb[0].mxu0 %v170
  %v290 = vpop.f32.mrb[0].mxu0
  %v291 = vadd.f32 0.0, %v290
  %v292 = vpop.f32.mrb[0].mxu0
  %v293 = vpop.f32.mrb[0].mxu0
  %v294 = vadd.f32 0.0, %v293
  %v295 = vpop.f32.mrb[0].mxu0
  %296 = vmatprep.mubr.bf16.mxu0 0
  %297 = vmatmul.mubr.bf16.gmra.mrb[0].mxu0 %v171
  %v298 = vpop.f32.mrb[0].mxu0
  %v299 = vadd.f32 0.0, %v298
  %v300 = vpop.f32.mrb[0].mxu0
  %v301 = vpop.f32.mrb[0].mxu0
  %v302 = vadd.f32 0.0, %v301
  %v303 = vpop.f32.mrb[0].mxu0
  %304 = vmatprep.mubr.bf16.mxu0 0
  %305 = vmatmul.mubr.bf16.gmra.mrb[0].mxu0 %v172
  %v306 = vpop.f32.mrb[0].mxu0
  %v307 = vadd.f32 0.0, %v306
  %v308 = vpop.f32.mrb[0].mxu0
  %v309 = vpop.f32.mrb[0].mxu0
  %v310 = vadd.f32 0.0, %v309
  %v311 = vpop.f32.mrb[0].mxu0
  %312 = vmatprep.mubr.bf16.mxu0 0
  %313 = vmatmul.mubr.bf16.gmra.mrb[0].mxu0 %v173
  %v314 = vpop.f32.mrb[0].mxu0
  %v315 = vadd.f32 0.0, %v314
  %v316 = vpop.f32.mrb[0].mxu0
  %v317 = vpop.f32.mrb[0].mxu0
  %v318 = vadd.f32 0.0, %v317
  %v319 = vpop.f32.mrb[0].mxu0
  %320 = vmatprep.mubr.bf16.mxu0 0
  %321 = vmatmul.mubr.bf16.gmra.mrb[0].mxu0 %v174
  %v322 = vpop.f32.mrb[0].mxu0
  %v323 = vadd.f32 0.0, %v322
  %v324 = vpop.f32.mrb[0].mxu0
  %v325 = vpop.f32.mrb[0].mxu0
  %v326 = vadd.f32 0.0, %v325
  %v327 = vpop.f32.mrb[0].mxu0
  %328 = vmatprep.mubr.bf16.mxu0 0
  %329 = vmatmul.mubr.bf16.gmra.mrb[0].mxu0 %v175
  %v330 = vpop.f32.mrb[0].mxu0
  %v331 = vadd.f32 0.0, %v330
  %v332 = vpop.f32.mrb[0].mxu0
  %v333 = vpop.f32.mrb[0].mxu0
  %v334 = vadd.f32 0.0, %v333
  %v335 = vpop.f32.mrb[0].mxu0
  %336 = vdwg.mxu0
  %v337 = vpack.c.bf16 %v278, %v275
  %v338 = vpack.c.bf16 %v286, %v283
  %v339 = vpack.c.bf16 %v294, %v291
  %v340 = vpack.c.bf16 %v302, %v299
  %v341 = vpack.c.bf16 %v310, %v307
  %v342 = vpack.c.bf16 %v318, %v315
  %v343 = vpack.c.bf16 %v326, %v323
  %v344 = vpack.c.bf16 %v334, %v331
  %v345 = vld [vmem:[%s3] sm:$0xf]
  %v346 = vld [vmem:[%s3 + $0x4] sm:$0xf]
  %v347 = vld [vmem:[%s3 + $0x8] sm:$0xf]
  %v348 = vld [vmem:[%s3 + $0xc] sm:$0xf]
  %v349 = vld [vmem:[%s3 + $0x10] sm:$0xf]
  %v350 = vld [vmem:[%s3 + $0x14] sm:$0xf]
  %v351 = vld [vmem:[%s3 + $0x18] sm:$0xf]
  %v352 = vld [vmem:[%s3 + $0x1c] sm:$0xf]
  %v353 = vld [vmem:[%s3 + $0x20] sm:$0xf]
  %v354 = vld [vmem:[%s3 + $0x24] sm:$0xf]
  %v355 = vld [vmem:[%s3 + $0x28] sm:$0xf]
  %v356 = vld [vmem:[%s3 + $0x2c] sm:$0xf]
  %v357 = vld [vmem:[%s3 + $0x30] sm:$0xf]
  %v358 = vld [vmem:[%s3 + $0x34] sm:$0xf]
  %v359 = vld [vmem:[%s3 + $0x38] sm:$0xf]
  %v360 = vld [vmem:[%s3 + $0x3c] sm:$0xf]
  %v377 = vunpack.c.l.b16 %v345
  %v378 = vunpack.c.l.b16 %v346
  %v379 = vunpack.c.l.b16 %v347
  %v380 = vunpack.c.l.b16 %v348
  %v381 = vunpack.c.l.b16 %v349
  %v382 = vunpack.c.l.b16 %v350
  %v383 = vunpack.c.l.b16 %v351
  %v384 = vunpack.c.l.b16 %v352
  %v385 = vunpack.c.l.b16 %v353
  %v386 = vunpack.c.l.b16 %v354
  %v387 = vunpack.c.l.b16 %v355
  %v388 = vunpack.c.l.b16 %v356
  %v389 = vunpack.c.l.b16 %v357
  %v390 = vunpack.c.l.b16 %v358
  %v391 = vunpack.c.l.b16 %v359
  %v392 = vunpack.c.l.b16 %v360
  %v393 = vpack.c.b16 %v378, %v377
  %v394 = vpack.c.b16 %v380, %v379
  %v395 = vpack.c.b16 %v382, %v381
  %v396 = vpack.c.b16 %v384, %v383
  %v397 = vpack.c.b16 %v386, %v385
  %v398 = vpack.c.b16 %v388, %v387
  %v399 = vpack.c.b16 %v390, %v389
  %v400 = vpack.c.b16 %v392, %v391
  %409 = vmatprep.subr.bf16.mxu0 0
  %410 = vmatpush1.bf16.msra.mxu0 %v337
  %411 = vmatprep.subr.bf16.mxu0 0
  %412 = vmatpush1.bf16.msra.mxu0 %v338
  %413 = vmatprep.subr.bf16.mxu0 0
  %414 = vmatpush1.bf16.msra.mxu0 %v339
  %415 = vmatprep.subr.bf16.mxu0 0
  %416 = vmatpush1.bf16.msra.mxu0 %v340
  %417 = vmatprep.subr.bf16.mxu0 0
  %418 = vmatpush1.bf16.msra.mxu0 %v341
  %419 = vmatprep.subr.bf16.mxu0 0
  %420 = vmatpush1.bf16.msra.mxu0 %v342
  %421 = vmatprep.subr.bf16.mxu0 0
  %422 = vmatpush1.bf16.msra.mxu0 %v343
  %423 = vmatprep.subr.bf16.mxu0 0
  %424 = vmatpush1.bf16.msra.mxu0 %v344
  %425 = vmatprep.subr.bf16.mxu0 0
  %426 = vmatpush1.bf16.msra.mxu0 0
  %427 = vmatprep.subr.bf16.mxu0 0
  %428 = vmatpush1.bf16.msra.mxu0 0
  %429 = vmatprep.subr.bf16.mxu0 0
  %430 = vmatpush1.bf16.msra.mxu0 0
  %431 = vmatprep.subr.bf16.mxu0 0
  %432 = vmatpush1.bf16.msra.mxu0 0
  %433 = vmatprep.subr.bf16.mxu0 0
  %434 = vmatpush1.bf16.msra.mxu0 0
  %435 = vmatprep.subr.bf16.mxu0 0
  %436 = vmatpush1.bf16.msra.mxu0 0
  %437 = vmatprep.subr.bf16.mxu0 0
  %438 = vmatpush1.bf16.msra.mxu0 0
  %439 = vmatprep.subr.bf16.mxu0 0
  %440 = vmatpush1.bf16.msra.mxu0 0
  %441 = vmatprep.mubr.bf16.mxu0 0
  %442 = vmatmul.mubr.bf16.gmra.mrb[0].mxu0 %v393
  %v443 = vpop.f32.mrb[0].mxu0
  %v444 = vadd.f32 0.0, %v443
  %v445 = vpop.f32.mrb[0].mxu0
  %v446 = vpop.f32.mrb[0].mxu0
  %v447 = vadd.f32 0.0, %v446
  %v448 = vpop.f32.mrb[0].mxu0
  %449 = vmatprep.mubr.bf16.mxu0 0
  %450 = vmatmul.mubr.bf16.gmra.mrb[0].mxu0 %v394
  %v451 = vpop.f32.mrb[0].mxu0
  %v452 = vadd.f32 0.0, %v451
  %v453 = vpop.f32.mrb[0].mxu0
  %v454 = vpop.f32.mrb[0].mxu0
  %v455 = vadd.f32 0.0, %v454
  %v456 = vpop.f32.mrb[0].mxu0
  %457 = vmatprep.mubr.bf16.mxu0 0
  %458 = vmatmul.mubr.bf16.gmra.mrb[0].mxu0 %v395
  %v459 = vpop.f32.mrb[0].mxu0
  %v460 = vadd.f32 0.0, %v459
  %v461 = vpop.f32.mrb[0].mxu0
  %v462 = vpop.f32.mrb[0].mxu0
  %v463 = vadd.f32 0.0, %v462
  %v464 = vpop.f32.mrb[0].mxu0
  %465 = vmatprep.mubr.bf16.mxu0 0
  %466 = vmatmul.mubr.bf16.gmra.mrb[0].mxu0 %v396
  %v467 = vpop.f32.mrb[0].mxu0
  %v468 = vadd.f32 0.0, %v467
  %v469 = vpop.f32.mrb[0].mxu0
  %v470 = vpop.f32.mrb[0].mxu0
  %v471 = vadd.f32 0.0, %v470
  %v472 = vpop.f32.mrb[0].mxu0
  %473 = vmatprep.mubr.bf16.mxu0 0
  %474 = vmatmul.mubr.bf16.gmra.mrb[0].mxu0 %v397
  %v475 = vpop.f32.mrb[0].mxu0
  %v476 = vadd.f32 0.0, %v475
  %v477 = vpop.f32.mrb[0].mxu0
  %v478 = vpop.f32.mrb[0].mxu0
  %v479 = vadd.f32 0.0, %v478
  %v480 = vpop.f32.mrb[0].mxu0
  %481 = vmatprep.mubr.bf16.mxu0 0
  %482 = vmatmul.mubr.bf16.gmra.mrb[0].mxu0 %v398
  %v483 = vpop.f32.mrb[0].mxu0
  %v484 = vadd.f32 0.0, %v483
  %v485 = vpop.f32.mrb[0].mxu0
  %v486 = vpop.f32.mrb[0].mxu0
  %v487 = vadd.f32 0.0, %v486
  %v488 = vpop.f32.mrb[0].mxu0
  %489 = vmatprep.mubr.bf16.mxu0 0
  %490 = vmatmul.mubr.bf16.gmra.mrb[0].mxu0 %v399
  %v491 = vpop.f32.mrb[0].mxu0
  %v492 = vadd.f32 0.0, %v491
  %v493 = vpop.f32.mrb[0].mxu0
  %v494 = vpop.f32.mrb[0].mxu0
  %v495 = vadd.f32 0.0, %v494
  %v496 = vpop.f32.mrb[0].mxu0
  %497 = vmatprep.mubr.bf16.mxu0 0
  %498 = vmatmul.mubr.bf16.gmra.mrb[0].mxu0 %v400
  %v499 = vpop.f32.mrb[0].mxu0
  %v500 = vadd.f32 0.0, %v499
  %v501 = vpop.f32.mrb[0].mxu0
  %v502 = vpop.f32.mrb[0].mxu0
  %v503 = vadd.f32 0.0, %v502
  %v504 = vpop.f32.mrb[0].mxu0
  %505 = vdwg.mxu0
  %v506 = vld [vmem:[%s4] sm:$0xff]
  %v507 = vld [vmem:[%s4 + $0x8] sm:$0xff]
  %v508 = vld [vmem:[%s4 + $0x10] sm:$0xff]
  %v509 = vld [vmem:[%s4 + $0x18] sm:$0xff]
  %v510 = vld [vmem:[%s4 + $0x20] sm:$0xff]
  %v511 = vld [vmem:[%s4 + $0x28] sm:$0xff]
  %v512 = vld [vmem:[%s4 + $0x30] sm:$0xff]
  %v513 = vld [vmem:[%s4 + $0x38] sm:$0xff]
  %v514 = vld [vmem:[%s4 + $0x40] sm:$0xff]
  %v515 = vld [vmem:[%s4 + $0x48] sm:$0xff]
  %v516 = vld [vmem:[%s4 + $0x50] sm:$0xff]
  %v517 = vld [vmem:[%s4 + $0x58] sm:$0xff]
  %v518 = vld [vmem:[%s4 + $0x60] sm:$0xff]
  %v519 = vld [vmem:[%s4 + $0x68] sm:$0xff]
  %v520 = vld [vmem:[%s4 + $0x70] sm:$0xff]
  %v521 = vld [vmem:[%s4 + $0x78] sm:$0xff]
  %523 = vset.pattern.permute.xlu0 0
  %524 = vperm.xlu0 %523, %v506
  %v525 = vpop.permute.xlu0 %524
  %528 = vset.pattern.permute.xlu0 0
  %529 = vperm.xlu0 %528, %v507
  %v530 = vpop.permute.xlu0 %529
  %533 = vset.pattern.permute.xlu0 0
  %534 = vperm.xlu0 %533, %v508
  %v535 = vpop.permute.xlu0 %534
  %538 = vset.pattern.permute.xlu0 0
  %539 = vperm.xlu0 %538, %v509
  %v540 = vpop.permute.xlu0 %539
  %543 = vset.pattern.permute.xlu0 0
  %544 = vperm.xlu0 %543, %v510
  %v545 = vpop.permute.xlu0 %544
  %548 = vset.pattern.permute.xlu0 0
  %549 = vperm.xlu0 %548, %v511
  %v550 = vpop.permute.xlu0 %549
  %553 = vset.pattern.permute.xlu0 0
  %554 = vperm.xlu0 %553, %v512
  %v555 = vpop.permute.xlu0 %554
  %558 = vset.pattern.permute.xlu0 0
  %559 = vperm.xlu0 %558, %v513
  %v560 = vpop.permute.xlu0 %559
  %563 = vset.pattern.permute.xlu0 0
  %564 = vperm.xlu0 %563, %v514
  %v565 = vpop.permute.xlu0 %564
  %568 = vset.pattern.permute.xlu0 0
  %569 = vperm.xlu0 %568, %v515
  %v570 = vpop.permute.xlu0 %569
  %573 = vset.pattern.permute.xlu0 0
  %574 = vperm.xlu0 %573, %v516
  %v575 = vpop.permute.xlu0 %574
  %578 = vset.pattern.permute.xlu0 0
  %579 = vperm.xlu0 %578, %v517
  %v580 = vpop.permute.xlu0 %579
  %583 = vset.pattern.permute.xlu0 0
  %584 = vperm.xlu0 %583, %v518
  %v585 = vpop.permute.xlu0 %584
  %588 = vset.pattern.permute.xlu0 0
  %589 = vperm.xlu0 %588, %v519
  %v590 = vpop.permute.xlu0 %589
  %593 = vset.pattern.permute.xlu0 0
  %594 = vperm.xlu0 %593, %v520
  %v595 = vpop.permute.xlu0 %594
  %598 = vset.pattern.permute.xlu0 0
  %599 = vperm.xlu0 %598, %v521
  %v600 = vpop.permute.xlu0 %599
  %v602 = vmul.f32 %v444, %v525
  %v603 = vmul.f32 %v447, %v530
  %v604 = vmul.f32 %v452, %v535
  %v605 = vmul.f32 %v455, %v540
  %v606 = vmul.f32 %v460, %v545
  %v607 = vmul.f32 %v463, %v550
  %v608 = vmul.f32 %v468, %v555
  %v609 = vmul.f32 %v471, %v560
  %v610 = vmul.f32 %v476, %v565
  %v611 = vmul.f32 %v479, %v570
  %v612 = vmul.f32 %v484, %v575
  %v613 = vmul.f32 %v487, %v580
  %v614 = vmul.f32 %v492, %v585
  %v615 = vmul.f32 %v495, %v590
  %v616 = vmul.f32 %v500, %v595
  %v617 = vmul.f32 %v503, %v600
  %v618 = vld [vmem:[%s5] sm:$0x1]
  %v620 = vlaneseq
  %v621 = vshrl.u32 %v620, 7
  %v622 = vsub.s32 0, %v621
  %v623 = vrot.slane %v618, %v622
  %v625 = vadd.f32 %v602, %v623
  %v626 = vadd.f32 %v603, %v623
  %v627 = vadd.f32 %v604, %v623
  %v628 = vadd.f32 %v605, %v623
  %v629 = vadd.f32 %v606, %v623
  %v630 = vadd.f32 %v607, %v623
  %v631 = vadd.f32 %v608, %v623
  %v632 = vadd.f32 %v609, %v623
  %v633 = vadd.f32 %v610, %v623
  %v634 = vadd.f32 %v611, %v623
  %v635 = vadd.f32 %v612, %v623
  %v636 = vadd.f32 %v613, %v623
  %v637 = vadd.f32 %v614, %v623
  %v638 = vadd.f32 %v615, %v623
  %v639 = vadd.f32 %v616, %v623
  %v640 = vadd.f32 %v617, %v623
  %v641 = vmax.f32 %v625, 0.0
  %v642 = vmax.f32 %v626, 0.0
  %v643 = vmax.f32 %v627, 0.0
  %v644 = vmax.f32 %v628, 0.0
  %v645 = vmax.f32 %v629, 0.0
  %v646 = vmax.f32 %v630, 0.0
  %v647 = vmax.f32 %v631, 0.0
  %v648 = vmax.f32 %v632, 0.0
  %v649 = vmax.f32 %v633, 0.0
  %v650 = vmax.f32 %v634, 0.0
  %v651 = vmax.f32 %v635, 0.0
  %v652 = vmax.f32 %v636, 0.0
  %v653 = vmax.f32 %v637, 0.0
  %v654 = vmax.f32 %v638, 0.0
  %v655 = vmax.f32 %v639, 0.0
  %v656 = vmax.f32 %v640, 0.0
  %v657 = vpack.c.bf16 %v642, %v641
  %v658 = vpack.c.bf16 %v644, %v643
  %v659 = vpack.c.bf16 %v646, %v645
  %v660 = vpack.c.bf16 %v648, %v647
  %v661 = vpack.c.bf16 %v650, %v649
  %v662 = vpack.c.bf16 %v652, %v651
  %v663 = vpack.c.bf16 %v654, %v653
  %v664 = vpack.c.bf16 %v656, %v655
  %v673 = vunpack.c.l.b16 %v657
  %v674 = vunpack.c.h.b16 %v657
  %v675 = vunpack.c.l.b16 %v658
  %v676 = vunpack.c.h.b16 %v658
  %v677 = vunpack.c.l.b16 %v659
  %v678 = vunpack.c.h.b16 %v659
  %v679 = vunpack.c.l.b16 %v660
  %v680 = vunpack.c.h.b16 %v660
  %v681 = vunpack.c.l.b16 %v661
  %v682 = vunpack.c.h.b16 %v661
  %v683 = vunpack.c.l.b16 %v662
  %v684 = vunpack.c.h.b16 %v662
  %v685 = vunpack.c.l.b16 %v663
  %v686 = vunpack.c.h.b16 %v663
  %v687 = vunpack.c.l.b16 %v664
  %v688 = vunpack.c.h.b16 %v664
  %v689 = vpack.c.b16 %v673, %v673
  %v690 = vpack.c.b16 %v674, %v674
  %v691 = vpack.c.b16 %v675, %v675
  %v692 = vpack.c.b16 %v676, %v676
  %v693 = vpack.c.b16 %v677, %v677
  %v694 = vpack.c.b16 %v678, %v678
  %v695 = vpack.c.b16 %v679, %v679
  %v696 = vpack.c.b16 %v680, %v680
  %v697 = vpack.c.b16 %v681, %v681
  %v698 = vpack.c.b16 %v682, %v682
  %v699 = vpack.c.b16 %v683, %v683
  %v700 = vpack.c.b16 %v684, %v684
  %v701 = vpack.c.b16 %v685, %v685
  %v702 = vpack.c.b16 %v686, %v686
  %v703 = vpack.c.b16 %v687, %v687
  %v704 = vpack.c.b16 %v688, %v688
  %721 = vst [vmem:[%s6] sm:$0xf] %v689
  %722 = vst [vmem:[%s6 + $0x4] sm:$0xf] %v690
  %723 = vst [vmem:[%s6 + $0x8] sm:$0xf] %v691
  %724 = vst [vmem:[%s6 + $0xc] sm:$0xf] %v692
  %725 = vst [vmem:[%s6 + $0x10] sm:$0xf] %v693
  %726 = vst [vmem:[%s6 + $0x14] sm:$0xf] %v694
  %727 = vst [vmem:[%s6 + $0x18] sm:$0xf] %v695
  %728 = vst [vmem:[%s6 + $0x1c] sm:$0xf] %v696
  %729 = vst [vmem:[%s6 + $0x20] sm:$0xf] %v697
  %730 = vst [vmem:[%s6 + $0x24] sm:$0xf] %v698
  %731 = vst [vmem:[%s6 + $0x28] sm:$0xf] %v699
  %732 = vst [vmem:[%s6 + $0x2c] sm:$0xf] %v700
  %733 = vst [vmem:[%s6 + $0x30] sm:$0xf] %v701
  %734 = vst [vmem:[%s6 + $0x34] sm:$0xf] %v702
  %735 = vst [vmem:[%s6 + $0x38] sm:$0xf] %v703
  %736 = vst [vmem:[%s6 + $0x3c] sm:$0xf] %v704
  // Predicated region
  $region26: #{gcn_forward.2} parent=0 // pred_check
    _
  $region27: #{gcn_forward.2} parent=0 // pred_check_branch
    %738 = sbr.rel (0) target = $region29
  $region28: #{gcn_forward.2} parent=0 // pred_region
    _
  $region29: #{gcn_forward.2} parent=0 // pred_fallthru
    _
  // Predicated region
  $region30: #{gcn_forward.2} parent=0 // pred_check
    _
  $region31: #{gcn_forward.2} parent=0 // pred_check_branch
    %740 = sbr.rel (0) target = $region33
  $region32: #{gcn_forward.2} parent=0 // pred_region
    _
  $region33: #{gcn_forward.2} parent=0 // pred_fallthru
    _

</llo_original>
